<compile_context>
chip_gen: v7x
topology: tpu7x:2x2x1
jax: 0.10.0
libtpu: 0.0.40
codegen_flags: <defaults>
</compile_context>

<pallas_src>
import functools

import jax
import jax.numpy as jnp
import numpy as np
from jax import lax
from jax.experimental import pallas as pl
from jax.experimental.pallas import tpu as pltpu


def _shifted(a, shift, out_size, axis):
    """result[i] = a[i + shift] along `axis`, zero where out of range.

    `shift`, `out_size`, `axis` are static Python ints, so this is a static
    slice plus (at most) a concat with a zero fringe -- no padded scratch
    buffer and no full-array zero-fill.
    """
    n = a.shape[axis]
    lo = max(0, -shift)                 # first valid output index
    hi = min(out_size, n - shift)       # one past last valid output index

    def _zeros(extent):
        shape = list(a.shape)
        shape[axis] = extent
        return jnp.zeros(shape, a.dtype)

    if hi <= lo:
        return _zeros(out_size)
    idx = [slice(None)] * a.ndim
    idx[axis] = slice(lo + shift, hi + shift)
    pieces = []
    if lo:
        pieces.append(_zeros(lo))
    pieces.append(a[tuple(idx)])
    if out_size - hi:
        pieces.append(_zeros(out_size - hi))
    return pieces[0] if len(pieces) == 1 else jnp.concatenate(pieces, axis=axis)


def _depthwise_kernel(x_ref, w1_ref, b1_ref, w2_ref,
                      y2_ref, ssum_ref, ssq_ref, *, K, p):
    """Pass 1 -- one batch image per grid step.

    x_ref:    (1, H, W, C)       input tile, NHWC
    w1_ref:   (K, C)             depthwise weights along W (torch (C,1,1,K))
    b1_ref:   (1, C)             conv1 bias
    w2_ref:   (K, C)             depthwise weights along H (torch (C,1,K,1))
    y2_ref:   (1, Hout, Wout, C) depthwise-conv output (pre-BN)
    ssum_ref: (1, 1, C)          per-image partial sum  over (H, W)
    ssq_ref:  (1, 1, C)          per-image partial sum of squares
    """
    x = x_ref[0].astype(jnp.float32)                  # (H, W, C)
    H, W, C = x.shape
    Wout = W + 2 * p - K + 1
    Hout = H + 2 * p - K + 1

    # conv1: depthwise (1, K) cross-correlation along W, + bias.  K unrolled.
    y1 = jnp.zeros((H, Wout, C), jnp.float32)
    for k in range(K):
        y1 = y1 + _shifted(x, k - p, Wout, axis=1) * w1_ref[k:k + 1, :]
    y1 = y1 + b1_ref[...]

    # conv2: depthwise (K, 1) along H, no bias.
    # (Pad rows of y1 are ZERO, not conv1-bias -- matches torch semantics.)
    y2 = jnp.zeros((Hout, Wout, C), jnp.float32)
    for k in range(K):
        y2 = y2 + _shifted(y1, k - p, Hout, axis=0) * w2_ref[k:k + 1, :]

    y2_ref[0] = y2.astype(y2_ref.dtype)

    # BN statistics fused into the conv pass (per-image partials; the global
    # reduction over N is a tiny (N, C) XLA op in the wrapper, which keeps
    # this grid axis "parallel" instead of a sequential accumulator).
    y2f = y2.reshape(Hout * Wout, C)
    ssum_ref[0] = jnp.sum(y2f, axis=0, keepdims=True)
    ssq_ref[0] = jnp.sum(y2f * y2f, axis=0, keepdims=True)


def _pointwise_kernel(y2_ref, pw_ref, b_ref, o_ref):
    """Pass 2 -- BN (pre-folded into pw / bias) + pointwise 1x1 conv.

    y2_ref: (1, TH, Wout, C);  pw_ref: (C, P);  b_ref: (1, P)
    o_ref:  (1, TH, Wout, P)
    """
    _, TH, Wout, C = y2_ref.shape
    y = y2_ref[0].reshape(TH * Wout, C)               # leading-dim merge: free
    out = jnp.dot(y, pw_ref[...], preferred_element_type=jnp.float32)
    out = out + b_ref[...]
    o_ref[0] = out.reshape(TH, Wout, -1).astype(o_ref.dtype)


def _vmem_limit(*block_bytes):
    """Explicit scoped-VMEM budget: double-buffered pipeline copies plus
    headroom for value temporaries/spills, capped under v7x's 64 MiB/TC."""
    need = 2 * sum(int(b) for b in block_bytes)
    need = 3 * need + (8 << 20)
    return int(min(max(need, 32 << 20), 48 << 20))


def _row_tile(hout, wout, c, p_out, itemsize, budget=2 << 20):
    """Largest divisor of Hout whose (TH, Wout, max(C,P)) slab fits `budget`."""
    best = 1
    for th in range(1, hout + 1):
        if hout % th == 0 and th * wout * max(c, p_out) * itemsize <= budget:
            best = th
    return best


def separable_conv2d(x_nchw, params, *, kernel_size=3, stride=1, padding=1,
                     dilation=1, eps=1e-5, inter_dtype=jnp.float32):
    """NCHW in / NCHW out, matching the PyTorch module (training-mode BN).

    `inter_dtype` controls the HBM storage dtype of x / the y2 intermediate;
    bf16 is recommended on v6e/v7x (halves HBM traffic), f32 keeps the
    self-test bit-tight and is the safe choice on v5e.
    """
    # TODO(synk): only the default stride=1 / dilation=1 path is implemented.
    assert stride == 1 and dilation == 1
    N, C, H, W = x_nchw.shape
    K, p = kernel_size, padding
    Wout = W + 2 * p - K + 1
    Hout = H + 2 * p - K + 1
    P = params["pw"].shape[1]
    itemsize = jnp.dtype(inter_dtype).itemsize

    # TODO(synk): in an NHWC end-to-end pipeline these boundary transposes
    # (two full HBM passes) disappear; for production C,P >= 128 NHWC is the
    # lane-dense layout, for the tiny C/P used here lanes are under-occupied.
    x_nhwc = jnp.transpose(x_nchw, (0, 2, 3, 1)).astype(inter_dtype)

    # ---- pass 1: depthwise convs + per-image partial BN statistics --------
    # TODO(synk): add halo-aware H tiling (manual DMA) for images too large
    # for one (H, W, C) slab per grid step.
    dw = functools.partial(_depthwise_kernel, K=K, p=p)
    y2, ssum, ssq = pl.pallas_call(
        dw,
        out_shape=(
            jax.ShapeDtypeStruct((N, Hout, Wout, C), inter_dtype),
            jax.ShapeDtypeStruct((N, 1, C), jnp.float32),
            jax.ShapeDtypeStruct((N, 1, C), jnp.float32),
        ),
        grid=(N,),
        in_specs=[
            pl.BlockSpec((1, H, W, C), lambda n: (n, 0, 0, 0)),
            pl.BlockSpec((K, C), lambda n: (0, 0)),      # resident weights
            pl.BlockSpec((1, C), lambda n: (0, 0)),
            pl.BlockSpec((K, C), lambda n: (0, 0)),
        ],
        out_specs=(
            pl.BlockSpec((1, Hout, Wout, C), lambda n: (n, 0, 0, 0)),
            pl.BlockSpec((1, 1, C), lambda n: (n, 0, 0)),
            pl.BlockSpec((1, 1, C), lambda n: (n, 0, 0)),
        ),
        compiler_params=pltpu.CompilerParams(
            dimension_semantics=("parallel",),
            vmem_limit_bytes=_vmem_limit(H * W * C * itemsize,
                                         Hout * Wout * C * itemsize),
        ),
    )(x_nhwc,
      params["w1"].astype(jnp.float32),
      params["b1"].astype(jnp.float32),
      params["w2"].astype(jnp.float32))

    # ---- global BN statistics + folding (tiny (N,C)/(C,P) XLA ops) --------
    count = float(N * Hout * Wout)
    mean = jnp.sum(ssum, axis=0) / count                       # (1, C)
    var = jnp.sum(ssq, axis=0) / count - mean * mean           # biased (train BN)
    scale = params["gamma"] * lax.rsqrt(var + eps)             # (1, C)
    shift = params["beta"] - mean * scale                      # (1, C)
    # (y2*scale + shift) @ pw  ==  y2 @ (diag(scale) pw) + shift @ pw
    pw_scaled = (scale.reshape(C, 1) * params["pw"]).astype(inter_dtype)  # (C, P)
    pw_bias = (shift @ params["pw"]).astype(jnp.float32)                  # (1, P)

    # ---- pass 2: folded BN + pointwise 1x1 conv (tiled MXU matmul) --------
    TH = _row_tile(Hout, Wout, C, P, itemsize)
    out_nhwc = pl.pallas_call(
        _pointwise_kernel,
        out_shape=jax.ShapeDtypeStruct((N, Hout, Wout, P), jnp.float32),
        grid=(N, Hout // TH),
        in_specs=[
            pl.BlockSpec((1, TH, Wout, C), lambda n, h: (n, h, 0, 0)),
            pl.BlockSpec((C, P), lambda n, h: (0, 0)),   # resident weights
            pl.BlockSpec((1, P), lambda n, h: (0, 0)),
        ],
        out_specs=pl.BlockSpec((1, TH, Wout, P), lambda n, h: (n, h, 0, 0)),
        compiler_params=pltpu.CompilerParams(
            dimension_semantics=("parallel", "parallel"),
            vmem_limit_bytes=_vmem_limit(TH * Wout * C * itemsize,
                                         TH * Wout * P * 4),
        ),
    )(y2, pw_scaled, pw_bias)

    return jnp.transpose(out_nhwc, (0, 3, 1, 2))  # back to NCHW


def _reference(x_nchw, params, *, kernel_size=3, padding=1, eps=1e-5):
    """Pure-JAX reference reproducing the PyTorch forward (for verification)."""
    C = x_nchw.shape[1]
    K, p = kernel_size, padding
    dn = ("NCHW", "OIHW", "NCHW")
    w1 = params["w1"].T.reshape(C, 1, 1, K)        # torch conv1.weight
    w2 = params["w2"].T.reshape(C, 1, K, 1)        # torch conv2.weight
    y = lax.conv_general_dilated(x_nchw, w1, (1, 1), ((0, 0), (p, p)),
                                 feature_group_count=C, dimension_numbers=dn)
    y = y + params["b1"].reshape(1, C, 1, 1)
    y = lax.conv_general_dilated(y, w2, (1, 1), ((p, p), (0, 0)),
                                 feature_group_count=C, dimension_numbers=dn)
    mean = jnp.mean(y, axis=(0, 2, 3), keepdims=True)
    var = jnp.mean((y - mean) ** 2, axis=(0, 2, 3), keepdims=True)
    y = (y - mean) * lax.rsqrt(var + eps)
    y = y * params["gamma"].reshape(1, C, 1, 1) + params["beta"].reshape(1, C, 1, 1)
    return jnp.einsum("nchw,cp->nphw", y, params["pw"])


if __name__ == "__main__":
    inplanes, planes, ksize = 4, 8, 3
    N, H, W = 2, 16, 16

    key = jax.random.PRNGKey(0)
    k1, k2, k3, k4, k5, k6, k7 = jax.random.split(key, 7)
    params = {
        # conv1: nn.Conv2d(C, C, (1,K), groups=C, bias=True) -> weight (C,1,1,K), bias (C,)
        "w1": 0.2 * jax.random.normal(k1, (ksize, inplanes), jnp.float32),
        "b1": 0.1 * jax.random.normal(k2, (1, inplanes), jnp.float32),
        # conv2: nn.Conv2d(C, C, (K,1), groups=C, bias=False) -> weight (C,1,K,1)
        "w2": 0.2 * jax.random.normal(k3, (ksize, inplanes), jnp.float32),
        # bn: BatchNorm2d(C) affine params
        "gamma": 1.0 + 0.1 * jax.random.normal(k4, (1, inplanes), jnp.float32),
        "beta": 0.1 * jax.random.normal(k5, (1, inplanes), jnp.float32),
        # pointwise: nn.Conv2d(C, P, 1, bias=False) -> weight (P,C,1,1), stored as (C,P)
        "pw": 0.2 * jax.random.normal(k6, (inplanes, planes), jnp.float32),
    }
    x = jax.random.normal(k7, (N, inplanes, H, W), jnp.float32)

    out = separable_conv2d(x, params, kernel_size=ksize, padding=1)
    out = jax.block_until_ready(out)

    ref = jax.block_until_ready(_reference(x, params, kernel_size=ksize, padding=1))
    assert out.shape == (N, planes, H, W), out.shape
    assert np.allclose(np.asarray(out), np.asarray(ref), atol=1e-2, rtol=1e-2), (
        float(np.max(np.abs(np.asarray(out) - np.asarray(ref)))))

    print("KERNEL_OK")
</pallas_src>

<mosaic_0001>
module attributes {stable_mosaic.version = 11 : i64} {
  func.func @_depthwise_kernel(%arg0: i32, %arg1: memref<1x16x16x4xf32, #tpu.memory_space<vmem>>, %arg2: memref<3x4xf32, #tpu.memory_space<vmem>>, %arg3: memref<1x4xf32, #tpu.memory_space<vmem>>, %arg4: memref<3x4xf32, #tpu.memory_space<vmem>>, %arg5: memref<1x16x16x4xf32, #tpu.memory_space<vmem>>, %arg6: memref<1x1x4xf32, #tpu.memory_space<vmem>>, %arg7: memref<1x1x4xf32, #tpu.memory_space<vmem>>) attributes {dimension_semantics = [#tpu.dimension_semantics<parallel>], iteration_bounds = array<i64: 2>, scalar_prefetch = 0 : i64, scratch_operands = 0 : i64, tpu.core_type = #tpu.core_type<tc>, window_params = [{transform_indices = @transform_0, window_bounds = array<i64: 1, 16, 16, 4>}, {pipeline_mode = #tpu.pipeline_mode<synchronous>, transform_indices = @transform_1, window_bounds = array<i64: 3, 4>}, {pipeline_mode = #tpu.pipeline_mode<synchronous>, transform_indices = @transform_2, window_bounds = array<i64: 1, 4>}, {pipeline_mode = #tpu.pipeline_mode<synchronous>, transform_indices = @transform_3, window_bounds = array<i64: 3, 4>}, {transform_indices = @transform_4, window_bounds = array<i64: 1, 16, 16, 4>}, {transform_indices = @transform_5, window_bounds = array<i64: 1, 1, 4>}, {transform_indices = @transform_6, window_bounds = array<i64: 1, 1, 4>}]} {
    %c0 = arith.constant 0 : index
    %c0_0 = arith.constant 0 : index
    %c0_1 = arith.constant 0 : index
    %c0_2 = arith.constant 0 : index
    %0 = vector.load %arg1[%c0, %c0_0, %c0_1, %c0_2] : memref<1x16x16x4xf32, #tpu.memory_space<vmem>>, vector<1x16x16x4xf32>
    %1 = vector.shape_cast %0 : vector<1x16x16x4xf32> to vector<16x16x4xf32>
    %cst = arith.constant 0.000000e+00 : f32
    %2 = vector.broadcast %cst : f32 to vector<16x16x4xf32>
    %cst_3 = arith.constant 0.000000e+00 : f32
    %3 = vector.broadcast %cst_3 : f32 to vector<16x1x4xf32>
    %4 = vector.extract_strided_slice %1 {offsets = [0, 0, 0], sizes = [16, 15, 4], strides = [1, 1, 1]} : vector<16x16x4xf32> to vector<16x15x4xf32>
    %5 = tpu.concatenate %3, %4 in 1 : vector<16x1x4xf32>, vector<16x15x4xf32> -> vector<16x16x4xf32>
    %c0_4 = arith.constant 0 : index
    %c0_5 = arith.constant 0 : index
    %6 = vector.load %arg2[%c0_4, %c0_5] : memref<3x4xf32, #tpu.memory_space<vmem>>, vector<1x4xf32>
    %7 = vector.shape_cast %6 : vector<1x4xf32> to vector<1x1x4xf32>
    %8 = vector.broadcast %7 : vector<1x1x4xf32> to vector<16x16x4xf32>
    %9 = arith.mulf %5, %8 : vector<16x16x4xf32>
    %10 = arith.addf %2, %9 : vector<16x16x4xf32>
    %c1 = arith.constant 1 : index
    %c0_6 = arith.constant 0 : index
    %11 = vector.load %arg2[%c1, %c0_6] : memref<3x4xf32, #tpu.memory_space<vmem>>, vector<1x4xf32>
    %12 = vector.shape_cast %11 : vector<1x4xf32> to vector<1x1x4xf32>
    %13 = vector.broadcast %12 : vector<1x1x4xf32> to vector<16x16x4xf32>
    %14 = arith.mulf %1, %13 : vector<16x16x4xf32>
    %15 = arith.addf %10, %14 : vector<16x16x4xf32>
    %16 = vector.extract_strided_slice %1 {offsets = [0, 1, 0], sizes = [16, 15, 4], strides = [1, 1, 1]} : vector<16x16x4xf32> to vector<16x15x4xf32>
    %cst_7 = arith.constant 0.000000e+00 : f32
    %17 = vector.broadcast %cst_7 : f32 to vector<16x1x4xf32>
    %18 = tpu.concatenate %16, %17 in 1 : vector<16x15x4xf32>, vector<16x1x4xf32> -> vector<16x16x4xf32>
    %c2 = arith.constant 2 : index
    %c0_8 = arith.constant 0 : index
    %19 = vector.load %arg2[%c2, %c0_8] : memref<3x4xf32, #tpu.memory_space<vmem>>, vector<1x4xf32>
    %20 = vector.shape_cast %19 : vector<1x4xf32> to vector<1x1x4xf32>
    %21 = vector.broadcast %20 : vector<1x1x4xf32> to vector<16x16x4xf32>
    %22 = arith.mulf %18, %21 : vector<16x16x4xf32>
    %23 = arith.addf %15, %22 : vector<16x16x4xf32>
    %c0_9 = arith.constant 0 : index
    %c0_10 = arith.constant 0 : index
    %24 = vector.load %arg3[%c0_9, %c0_10] : memref<1x4xf32, #tpu.memory_space<vmem>>, vector<1x4xf32>
    %25 = vector.shape_cast %24 : vector<1x4xf32> to vector<1x1x4xf32>
    %26 = vector.broadcast %25 : vector<1x1x4xf32> to vector<16x16x4xf32>
    %27 = arith.addf %23, %26 : vector<16x16x4xf32>
    %cst_11 = arith.constant 0.000000e+00 : f32
    %28 = vector.broadcast %cst_11 : f32 to vector<16x16x4xf32>
    %cst_12 = arith.constant 0.000000e+00 : f32
    %29 = vector.broadcast %cst_12 : f32 to vector<1x16x4xf32>
    %30 = vector.extract_strided_slice %27 {offsets = [0, 0, 0], sizes = [15, 16, 4], strides = [1, 1, 1]} : vector<16x16x4xf32> to vector<15x16x4xf32>
    %31 = tpu.concatenate %29, %30 in 0 : vector<1x16x4xf32>, vector<15x16x4xf32> -> vector<16x16x4xf32>
    %c0_13 = arith.constant 0 : index
    %c0_14 = arith.constant 0 : index
    %32 = vector.load %arg4[%c0_13, %c0_14] : memref<3x4xf32, #tpu.memory_space<vmem>>, vector<1x4xf32>
    %33 = vector.shape_cast %32 : vector<1x4xf32> to vector<1x1x4xf32>
    %34 = vector.broadcast %33 : vector<1x1x4xf32> to vector<16x16x4xf32>
    %35 = arith.mulf %31, %34 : vector<16x16x4xf32>
    %36 = arith.addf %28, %35 : vector<16x16x4xf32>
    %c1_15 = arith.constant 1 : index
    %c0_16 = arith.constant 0 : index
    %37 = vector.load %arg4[%c1_15, %c0_16] : memref<3x4xf32, #tpu.memory_space<vmem>>, vector<1x4xf32>
    %38 = vector.shape_cast %37 : vector<1x4xf32> to vector<1x1x4xf32>
    %39 = vector.broadcast %38 : vector<1x1x4xf32> to vector<16x16x4xf32>
    %40 = arith.mulf %27, %39 : vector<16x16x4xf32>
    %41 = arith.addf %36, %40 : vector<16x16x4xf32>
    %42 = vector.extract_strided_slice %27 {offsets = [1, 0, 0], sizes = [15, 16, 4], strides = [1, 1, 1]} : vector<16x16x4xf32> to vector<15x16x4xf32>
    %cst_17 = arith.constant 0.000000e+00 : f32
    %43 = vector.broadcast %cst_17 : f32 to vector<1x16x4xf32>
    %44 = tpu.concatenate %42, %43 in 0 : vector<15x16x4xf32>, vector<1x16x4xf32> -> vector<16x16x4xf32>
    %c2_18 = arith.constant 2 : index
    %c0_19 = arith.constant 0 : index
    %45 = vector.load %arg4[%c2_18, %c0_19] : memref<3x4xf32, #tpu.memory_space<vmem>>, vector<1x4xf32>
    %46 = vector.shape_cast %45 : vector<1x4xf32> to vector<1x1x4xf32>
    %47 = vector.broadcast %46 : vector<1x1x4xf32> to vector<16x16x4xf32>
    %48 = arith.mulf %44, %47 : vector<16x16x4xf32>
    %49 = arith.addf %41, %48 : vector<16x16x4xf32>
    %c0_20 = arith.constant 0 : index
    %c0_21 = arith.constant 0 : index
    %c0_22 = arith.constant 0 : index
    %c0_23 = arith.constant 0 : index
    %50 = vector.load %arg5[%c0_20, %c0_21, %c0_22, %c0_23] : memref<1x16x16x4xf32, #tpu.memory_space<vmem>>, vector<1x16x16x4xf32>
    %51 = vector.shape_cast %50 : vector<1x16x16x4xf32> to vector<16x16x4xf32>
    %52 = vector.shape_cast %49 : vector<16x16x4xf32> to vector<1x16x16x4xf32>
    tpu.vector_store %arg5[%c0_20, %c0_21, %c0_22, %c0_23], %52 {strides = array<i32>} : memref<1x16x16x4xf32, #tpu.memory_space<vmem>>, vector<1x16x16x4xf32>,
    %53 = vector.shape_cast %49 : vector<16x16x4xf32> to vector<256x4xf32>
    %cst_24 = arith.constant dense<0.000000e+00> : vector<4xf32>
    %54 = vector.multi_reduction <add>, %53, %cst_24 [0] : vector<256x4xf32> to vector<4xf32>
    %55 = vector.shape_cast %54 : vector<4xf32> to vector<1x4xf32>
    %c0_25 = arith.constant 0 : index
    %c0_26 = arith.constant 0 : index
    %c0_27 = arith.constant 0 : index
    %56 = vector.load %arg6[%c0_25, %c0_26, %c0_27] : memref<1x1x4xf32, #tpu.memory_space<vmem>>, vector<1x1x4xf32>
    %57 = vector.shape_cast %56 : vector<1x1x4xf32> to vector<1x4xf32>
    %58 = vector.shape_cast %55 : vector<1x4xf32> to vector<1x1x4xf32>
    tpu.vector_store %arg6[%c0_25, %c0_26, %c0_27], %58 {strides = array<i32>} : memref<1x1x4xf32, #tpu.memory_space<vmem>>, vector<1x1x4xf32>,
    %59 = arith.mulf %53, %53 : vector<256x4xf32>
    %cst_28 = arith.constant dense<0.000000e+00> : vector<4xf32>
    %60 = vector.multi_reduction <add>, %59, %cst_28 [0] : vector<256x4xf32> to vector<4xf32>
    %61 = vector.shape_cast %60 : vector<4xf32> to vector<1x4xf32>
    %c0_29 = arith.constant 0 : index
    %c0_30 = arith.constant 0 : index
    %c0_31 = arith.constant 0 : index
    %62 = vector.load %arg7[%c0_29, %c0_30, %c0_31] : memref<1x1x4xf32, #tpu.memory_space<vmem>>, vector<1x1x4xf32>
    %63 = vector.shape_cast %62 : vector<1x1x4xf32> to vector<1x4xf32>
    %64 = vector.shape_cast %61 : vector<1x4xf32> to vector<1x1x4xf32>
    tpu.vector_store %arg7[%c0_29, %c0_30, %c0_31], %64 {strides = array<i32>} : memref<1x1x4xf32, #tpu.memory_space<vmem>>, vector<1x1x4xf32>,
    return
  }
  func.func @transform_0(%arg0: i32) -> (i32, i32, i32, i32) {
    %c0_i32 = arith.constant 0 : i32
    %c0_i32_0 = arith.constant 0 : i32
    %c0_i32_1 = arith.constant 0 : i32
    %c0_i32_2 = arith.constant 0 : i32
    return %arg0, %c0_i32, %c0_i32_0, %c0_i32_1 : i32, i32, i32, i32
  }
  func.func @transform_1(%arg0: i32) -> (i32, i32) {
    %c0_i32 = arith.constant 0 : i32
    %c0_i32_0 = arith.constant 0 : i32
    %c0_i32_1 = arith.constant 0 : i32
    return %c0_i32, %c0_i32_0 : i32, i32
  }
  func.func @transform_2(%arg0: i32) -> (i32, i32) {
    %c0_i32 = arith.constant 0 : i32
    %c0_i32_0 = arith.constant 0 : i32
    %c0_i32_1 = arith.constant 0 : i32
    return %c0_i32, %c0_i32_0 : i32, i32
  }
  func.func @transform_3(%arg0: i32) -> (i32, i32) {
    %c0_i32 = arith.constant 0 : i32
    %c0_i32_0 = arith.constant 0 : i32
    %c0_i32_1 = arith.constant 0 : i32
    return %c0_i32, %c0_i32_0 : i32, i32
  }
  func.func @transform_4(%arg0: i32) -> (i32, i32, i32, i32) {
    %c0_i32 = arith.constant 0 : i32
    %c0_i32_0 = arith.constant 0 : i32
    %c0_i32_1 = arith.constant 0 : i32
    %c0_i32_2 = arith.constant 0 : i32
    return %arg0, %c0_i32, %c0_i32_0, %c0_i32_1 : i32, i32, i32, i32
  }
  func.func @transform_5(%arg0: i32) -> (i32, i32, i32) {
    %c0_i32 = arith.constant 0 : i32
    %c0_i32_0 = arith.constant 0 : i32
    %c0_i32_1 = arith.constant 0 : i32
    return %arg0, %c0_i32, %c0_i32_0 : i32, i32, i32
  }
  func.func @transform_6(%arg0: i32) -> (i32, i32, i32) {
    %c0_i32 = arith.constant 0 : i32
    %c0_i32_0 = arith.constant 0 : i32
    %c0_i32_1 = arith.constant 0 : i32
    return %arg0, %c0_i32, %c0_i32_0 : i32, i32, i32
  }
}

</mosaic_0001>

<llo_original>
// kernel: tpu_custom_call.1
$region0: #{tpu_custom_call.1}
  #allocation0 [shape = 'u32[]', space=smem, size = 0x4, offset = 0x4, fixed_abs, tag = 'smem constant byte address 0x4 - core index']
  #allocation1 [shape = 'u32[144,128]{1,0:T(1,128)}', space=vmem, size = 0x12000, scoped, tag = 'internal scratch']
  %s0 = inlined_call_operand.vmem [shape: f32[2,16,16,4], index: 0, kind: input, shape index: {}]
  %s1 = inlined_call_operand.vmem [shape: f32[3,4], index: 1, kind: input, shape index: {}]
  %s2 = inlined_call_operand.vmem [shape: f32[1,4], index: 2, kind: input, shape index: {}]
  %s3 = inlined_call_operand.vmem [shape: f32[3,4], index: 3, kind: input, shape index: {}]
  %s4 = inlined_call_operand.vmem [shape: f32[2,16,16,4], index: 4, kind: output, shape index: {0}]
  %s5 = inlined_call_operand.hbm [shape: f32[2,1,4], index: 5, kind: output, shape index: {1}]
  %s6 = inlined_call_operand.hbm [shape: f32[2,1,4], index: 6, kind: output, shape index: {2}]
  %7 = xla_tuple %s4, %s5, %s6
  %s8 = sld [smem:[#allocation0]]
  $region65: #{tpu_custom_call.1} parent=0
    _
  %s10 = ssub.s32 1, %s8
  %s11 = scalar_select 0, %s10, %s8
  $region1: #{tpu_custom_call.1} parent=0
    #allocation2 [shape = 'u8[1024]{0}', space=vmem, size = 0x400, scoped, tag = 'output window, operand 1']
    #allocation3 [shape = 's32[2]{0}', space=sflag, size = 0x8, scoped, tag = 'scoped memory for tpu_custom_call.1']
    #allocation4 [shape = 'u8[1024]{0}', space=vmem, size = 0x400, scoped, tag = 'output window, operand 2']
    #allocation5 [shape = 's32[2]{0}', space=sflag, size = 0x8, scoped, tag = 'scoped memory for tpu_custom_call.1']
    %12 = vsyncpa [#allocation3], 0
    %s13 = scalar_lea.sflag [#allocation3], 1
    %14 = vsyncpa %s13, 0
    %15 = vsyncpa [#allocation5], 0
    %s16 = scalar_lea.sflag [#allocation5], 1
    %17 = vsyncpa %s16, 0
    loop: start=0, step=1, limit=4
    $region2: #{tpu_custom_call.1} parent=1 // loop_pre_header
      _
    $region3: #{tpu_custom_call.1} parent=1 // loop_header
      %s19 = sphi 0, %s23
      %p20 = scmp.ge.s32.totalorder %s19, 4
      %s29 = sphi 0, %s31
      %s32 = sphi 0, %s29
      %s33 = sphi 0, %s32
      %s49 = sphi 0, %s33
      %s53 = sphi 0, %s53
      %s55 = sphi 0, %s53
      %s56 = sphi 0, %s55
      %s70 = sphi 0, %s56
      %s74 = sphi 0, %s74
      %s76 = sphi 0, %s74
      %s77 = sphi 0, %s76
      %s91 = sphi 0, %s77
      %s95 = sphi 0, %s95
      %s97 = sphi 0, %s95
      %s98 = sphi 0, %s97
      %s112 = sphi 0, %s98
      %s118 = sphi 0, %s120
      %s121 = sphi 0, %s118
      %s122 = sphi 0, %s121
      %s138 = sphi 0, %s122
      %s144 = sphi 0, %s146
      %s147 = sphi 0, %s144
      %s148 = sphi 0, %s147
      %s164 = sphi 0, %s148
      %s170 = sphi 0, %s172
      %s173 = sphi 0, %s170
      %s174 = sphi 0, %s173
      %s190 = sphi 0, %s174
    $region4: #{tpu_custom_call.1} parent=1 // loop_header_branch
      %22 = sbr.rel (%p20) target = $region8
    $region5: #{tpu_custom_call.1} parent=1 // loop_body
      %s24 = ssub.s32 %s19, 1
      %s25 = ssub.s32 %s19, 2
      %s26 = sadd.s32 %s19, 1
      %s27 = ssub.s32 %s19, %s26
      %p28 = scmp.eq.s32.totalorder %s27, 0
      %s30 = sadd.s32 %s29, 1
      %s31 = scalar_select %p28, %s29, %s30
      %p34 = pneg %p28
      %p35 = scmp.eq.s32.totalorder %s19, 1
      %p36 = por %p34, %p35
      %p37 = scmp.ne.s32.totalorder %s29, %s32
      %p38 = scmp.eq.s32.totalorder %s19, 0
      %p39 = por %p37, %p38
      %p40 = scmp.ne.s32.totalorder %s29, %s32
      %p41 = scmp.eq.s32.totalorder %s24, 1
      %p42 = por %p40, %p41
      %p43 = scmp.ne.s32.totalorder %s32, %s33
      %p44 = scmp.eq.s32.totalorder %s24, 0
      %p45 = por %p43, %p44
      %p46 = scmp.ne.s32.totalorder %s32, %s33
      %p47 = scmp.eq.s32.totalorder %s25, 1
      %p48 = por %p46, %p47
      %p50 = scmp.ne.s32.totalorder %s33, %s49
      %p51 = scmp.eq.s32.totalorder %s25, 0
      %p52 = por %p50, %p51
      %s54 = sadd.s32 %s53, 1
      %p57 = scmp.eq.s32.totalorder %s19, 1
      %p58 = scmp.ne.s32.totalorder %s53, %s55
      %p59 = scmp.eq.s32.totalorder %s19, 0
      %p60 = por %p58, %p59
      %p61 = scmp.ne.s32.totalorder %s53, %s55
      %p62 = scmp.eq.s32.totalorder %s24, 1
      %p63 = por %p61, %p62
      %p64 = scmp.ne.s32.totalorder %s55, %s56
      %p65 = scmp.eq.s32.totalorder %s24, 0
      %p66 = por %p64, %p65
      %p67 = scmp.ne.s32.totalorder %s55, %s56
      %p68 = scmp.eq.s32.totalorder %s25, 1
      %p69 = por %p67, %p68
      %p71 = scmp.ne.s32.totalorder %s56, %s70
      %p72 = scmp.eq.s32.totalorder %s25, 0
      %p73 = por %p71, %p72
      %s75 = sadd.s32 %s74, 1
      %p78 = scmp.eq.s32.totalorder %s19, 1
      %p79 = scmp.ne.s32.totalorder %s74, %s76
      %p80 = scmp.eq.s32.totalorder %s19, 0
      %p81 = por %p79, %p80
      %p82 = scmp.ne.s32.totalorder %s74, %s76
      %p83 = scmp.eq.s32.totalorder %s24, 1
      %p84 = por %p82, %p83
      %p85 = scmp.ne.s32.totalorder %s76, %s77
      %p86 = scmp.eq.s32.totalorder %s24, 0
      %p87 = por %p85, %p86
      %p88 = scmp.ne.s32.totalorder %s76, %s77
      %p89 = scmp.eq.s32.totalorder %s25, 1
      %p90 = por %p88, %p89
      %p92 = scmp.ne.s32.totalorder %s77, %s91
      %p93 = scmp.eq.s32.totalorder %s25, 0
      %p94 = por %p92, %p93
      %s96 = sadd.s32 %s95, 1
      %p99 = scmp.eq.s32.totalorder %s19, 1
      %p100 = scmp.ne.s32.totalorder %s95, %s97
      %p101 = scmp.eq.s32.totalorder %s19, 0
      %p102 = por %p100, %p101
      %p103 = scmp.ne.s32.totalorder %s95, %s97
      %p104 = scmp.eq.s32.totalorder %s24, 1
      %p105 = por %p103, %p104
      %p106 = scmp.ne.s32.totalorder %s97, %s98
      %p107 = scmp.eq.s32.totalorder %s24, 0
      %p108 = por %p106, %p107
      %p109 = scmp.ne.s32.totalorder %s97, %s98
      %p110 = scmp.eq.s32.totalorder %s25, 1
      %p111 = por %p109, %p110
      %p113 = scmp.ne.s32.totalorder %s98, %s112
      %p114 = scmp.eq.s32.totalorder %s25, 0
      %p115 = por %p113, %p114
      %s116 = ssub.s32 %s19, %s26
      %p117 = scmp.eq.s32.totalorder %s116, 0
      %s119 = sadd.s32 %s118, 1
      %s120 = scalar_select %p117, %s118, %s119
      %p123 = pneg %p117
      %p124 = scmp.eq.s32.totalorder %s19, 1
      %p125 = por %p123, %p124
      %p126 = scmp.ne.s32.totalorder %s118, %s121
      %p127 = scmp.eq.s32.totalorder %s19, 0
      %p128 = por %p126, %p127
      %p129 = scmp.ne.s32.totalorder %s118, %s121
      %p130 = scmp.eq.s32.totalorder %s24, 1
      %p131 = por %p129, %p130
      %p132 = scmp.ne.s32.totalorder %s121, %s122
      %p133 = scmp.eq.s32.totalorder %s24, 0
      %p134 = por %p132, %p133
      %p135 = scmp.ne.s32.totalorder %s121, %s122
      %p136 = scmp.eq.s32.totalorder %s25, 1
      %p137 = por %p135, %p136
      %p139 = scmp.ne.s32.totalorder %s122, %s138
      %p140 = scmp.eq.s32.totalorder %s25, 0
      %p141 = por %p139, %p140
      %s142 = ssub.s32 %s19, %s26
      %p143 = scmp.eq.s32.totalorder %s142, 0
      %s145 = sadd.s32 %s144, 1
      %s146 = scalar_select %p143, %s144, %s145
      %p149 = pneg %p143
      %p150 = scmp.eq.s32.totalorder %s19, 1
      %p151 = por %p149, %p150
      %p152 = scmp.ne.s32.totalorder %s144, %s147
      %p153 = scmp.eq.s32.totalorder %s19, 0
      %p154 = por %p152, %p153
      %p155 = scmp.ne.s32.totalorder %s144, %s147
      %p156 = scmp.eq.s32.totalorder %s24, 1
      %p157 = por %p155, %p156
      %p158 = scmp.ne.s32.totalorder %s147, %s148
      %p159 = scmp.eq.s32.totalorder %s24, 0
      %p160 = por %p158, %p159
      %p161 = scmp.ne.s32.totalorder %s147, %s148
      %p162 = scmp.eq.s32.totalorder %s25, 1
      %p163 = por %p161, %p162
      %p165 = scmp.ne.s32.totalorder %s148, %s164
      %p166 = scmp.eq.s32.totalorder %s25, 0
      %p167 = por %p165, %p166
      %s168 = ssub.s32 %s19, %s26
      %p169 = scmp.eq.s32.totalorder %s168, 0
      %s171 = sadd.s32 %s170, 1
      %s172 = scalar_select %p169, %s170, %s171
      %p175 = pneg %p169
      %p176 = scmp.eq.s32.totalorder %s19, 1
      %p177 = por %p175, %p176
      %p178 = scmp.ne.s32.totalorder %s170, %s173
      %p179 = scmp.eq.s32.totalorder %s19, 0
      %p180 = por %p178, %p179
      %p181 = scmp.ne.s32.totalorder %s170, %s173
      %p182 = scmp.eq.s32.totalorder %s24, 1
      %p183 = por %p181, %p182
      %p184 = scmp.ne.s32.totalorder %s173, %s174
      %p185 = scmp.eq.s32.totalorder %s24, 0
      %p186 = por %p184, %p185
      %p187 = scmp.ne.s32.totalorder %s173, %s174
      %p188 = scmp.eq.s32.totalorder %s25, 1
      %p189 = por %p187, %p188
      %p191 = scmp.ne.s32.totalorder %s174, %s190
      %p192 = scmp.eq.s32.totalorder %s25, 0
      %p193 = por %p191, %p192
      %p194 = scmp.le.s32.totalorder 1, %s19
      %p195 = scmp.lt.s32.totalorder %s19, 3
      %p196 = pnand %p194, %p195
      %p197 = pneg %p196
      // Predicated region
      $region9: #{tpu_custom_call.1} parent=5 // pred_check
        _
      $region10: #{tpu_custom_call.1} parent=5 // pred_check_branch
        %199 = sbr.rel (%p196) target = $region12
      $region11: #{tpu_custom_call.1} parent=5 // pred_region
        %s200 = ssub.s32 %s19, 1
        // Predicated region
        $region13: #{tpu_custom_call.1} parent=11 // pred_check
          %p201 = pneg %p66
        $region14: #{tpu_custom_call.1} parent=11 // pred_check_branch
          %203 = sbr.rel (%p201) target = $region16
        $region15: #{tpu_custom_call.1} parent=11 // pred_region
          _
        $region16: #{tpu_custom_call.1} parent=11 // pred_fallthru
          _
        // Predicated region
        $region17: #{tpu_custom_call.1} parent=11 // pred_check
          %p204 = pneg %p87
        $region18: #{tpu_custom_call.1} parent=11 // pred_check_branch
          %206 = sbr.rel (%p204) target = $region20
        $region19: #{tpu_custom_call.1} parent=11 // pred_region
          _
        $region20: #{tpu_custom_call.1} parent=11 // pred_fallthru
          _
        // Predicated region
        $region21: #{tpu_custom_call.1} parent=11 // pred_check
          %p207 = pneg %p108
        $region22: #{tpu_custom_call.1} parent=11 // pred_check_branch
          %209 = sbr.rel (%p207) target = $region24
        $region23: #{tpu_custom_call.1} parent=11 // pred_region
          _
        $region24: #{tpu_custom_call.1} parent=11 // pred_fallthru
          _
      $region12: #{tpu_custom_call.1} parent=5 // pred_fallthru
        _
      %p210 = scmp.lt.s32.totalorder %s19, 2
      // Predicated region
      $region25: #{tpu_custom_call.1} parent=5 // pred_check
        %p211 = pneg %p210
      $region26: #{tpu_custom_call.1} parent=5 // pred_check_branch
        %213 = sbr.rel (%p211) target = $region28
      $region27: #{tpu_custom_call.1} parent=5 // pred_region
        // Predicated region
        $region29: #{tpu_custom_call.1} parent=27 // pred_check
          %p214 = pneg %p39
        $region30: #{tpu_custom_call.1} parent=27 // pred_check_branch
          %216 = sbr.rel (%p214) target = $region32
        $region31: #{tpu_custom_call.1} parent=27 // pred_region
          %p217 = scmp.lt.s32.totalorder %s19, 1
          %s218 = scalar_select %p217, %s19, 1
          %s219 = smul.addr %s218, 32
          %s220 = smul.addr %s219, 8
          %s221 = scalar_lea.vmem %s0, %s220
        $region32: #{tpu_custom_call.1} parent=27 // pred_fallthru
          _
      $region28: #{tpu_custom_call.1} parent=5 // pred_fallthru
        _
      %p222 = scmp.le.s32.totalorder 1, %s19
      %p223 = scmp.lt.s32.totalorder %s19, 3
      %p224 = pnand %p222, %p223
      %p225 = pneg %p224
      // Predicated region
      $region33: #{tpu_custom_call.1} parent=5 // pred_check
        _
      $region34: #{tpu_custom_call.1} parent=5 // pred_check_branch
        %227 = sbr.rel (%p224) target = $region36
      $region35: #{tpu_custom_call.1} parent=5 // pred_region
        %s228 = ssub.s32 %s19, 1
        %p229 = scmp.lt.s32.totalorder %s24, 1
        %s230 = scalar_select %p229, %s24, 1
        %s231 = smul.addr %s230, 32
        %s232 = smul.addr %s231, 8
        %s233 = scalar_lea.vmem %s0, %s232
        %p234 = pneg %p45
        %p235 = pneg %p42
        %p236 = pneg %p66
        %p237 = pneg %p63
        %p238 = pneg %p87
        %p239 = pneg %p84
        %p240 = pneg %p108
        %p241 = pneg %p105
        %p242 = pneg %p134
        %p243 = pneg %p131
        %p244 = scmp.lt.s32.totalorder %s24, 1
        %s245 = scalar_select %p244, %s24, 1
        %s246 = smul.addr %s245, 32
        %s247 = smul.addr %s246, 8
        %s248 = scalar_lea.vmem %s4, %s247
        %p249 = pneg %p160
        %p250 = pneg %p157
        %s251 = sand.u32 %s147, 1
        %s252 = scalar_lea.sflag [#allocation3], %s251
        %s253 = sand.u32 %s147, 1
        %s254 = scalar_lea.vmem [#allocation2], %s253
        %p255 = pneg %p186
        %p256 = pneg %p183
        %s257 = sand.u32 %s173, 1
        %s258 = scalar_lea.sflag [#allocation5], %s257
        %s259 = sand.u32 %s173, 1
        %s260 = scalar_lea.vmem [#allocation4], %s259
        %p261 = scmp.lt.s32.totalorder %s24, 1
        %s262 = scalar_select %p261, %s24, 1
        %s263 = smul.addr %s262, 32
        %s264 = smul.addr %s263, 8
        %s265 = scalar_lea.vmem %s0, %s264
        %p266 = scmp.lt.s32.totalorder %s24, 1
        %s267 = scalar_select %p266, %s24, 1
        %s268 = smul.addr %s267, 32
        %s269 = smul.addr %s268, 8
        %s270 = scalar_lea.vmem %s4, %s269
        %v271 = vld [vmem:[%s265] sm:$0xff]
        %v272 = vld [vmem:[%s265 + $0x8] sm:$0xff]
        %v273 = vld [vmem:[%s265 + $0x10] sm:$0xff]
        %v274 = vld [vmem:[%s265 + $0x18] sm:$0xff]
        %v275 = vld [vmem:[%s265 + $0x20] sm:$0xff]
        %v276 = vld [vmem:[%s265 + $0x28] sm:$0xff]
        %v277 = vld [vmem:[%s265 + $0x30] sm:$0xff]
        %v278 = vld [vmem:[%s265 + $0x38] sm:$0xff]
        %v279 = vld [vmem:[%s265 + $0x40] sm:$0xff]
        %v280 = vld [vmem:[%s265 + $0x48] sm:$0xff]
        %v281 = vld [vmem:[%s265 + $0x50] sm:$0xff]
        %v282 = vld [vmem:[%s265 + $0x58] sm:$0xff]
        %v283 = vld [vmem:[%s265 + $0x60] sm:$0xff]
        %v284 = vld [vmem:[%s265 + $0x68] sm:$0xff]
        %v285 = vld [vmem:[%s265 + $0x70] sm:$0xff]
        %v286 = vld [vmem:[%s265 + $0x78] sm:$0xff]
        %v287 = vld [vmem:[%s265 + $0x80] sm:$0xff]
        %v288 = vld [vmem:[%s265 + $0x88] sm:$0xff]
        %v289 = vld [vmem:[%s265 + $0x90] sm:$0xff]
        %v290 = vld [vmem:[%s265 + $0x98] sm:$0xff]
        %v291 = vld [vmem:[%s265 + $0xa0] sm:$0xff]
        %v292 = vld [vmem:[%s265 + $0xa8] sm:$0xff]
        %v293 = vld [vmem:[%s265 + $0xb0] sm:$0xff]
        %v294 = vld [vmem:[%s265 + $0xb8] sm:$0xff]
        %v295 = vld [vmem:[%s265 + $0xc0] sm:$0xff]
        %v296 = vld [vmem:[%s265 + $0xc8] sm:$0xff]
        %v297 = vld [vmem:[%s265 + $0xd0] sm:$0xff]
        %v298 = vld [vmem:[%s265 + $0xd8] sm:$0xff]
        %v299 = vld [vmem:[%s265 + $0xe0] sm:$0xff]
        %v300 = vld [vmem:[%s265 + $0xe8] sm:$0xff]
        %v301 = vld [vmem:[%s265 + $0xf0] sm:$0xff]
        %v302 = vld [vmem:[%s265 + $0xf8] sm:$0xff]
        %vm335 = vcmask 1040384
        %v336 = vrot.slane %v271, 7
        %v337 = vrot.slane %v272, 7
        %v338 = vsel %vm335, %v336, %v337
        %v339 = vrot.slane %v273, 7
        %v340 = vrot.slane %v274, 7
        %v341 = vsel %vm335, %v339, %v340
        %v342 = vrot.slane %v275, 7
        %v343 = vrot.slane %v276, 7
        %v344 = vsel %vm335, %v342, %v343
        %v345 = vrot.slane %v277, 7
        %v346 = vrot.slane %v278, 7
        %v347 = vsel %vm335, %v345, %v346
        %v348 = vrot.slane %v279, 7
        %v349 = vrot.slane %v280, 7
        %v350 = vsel %vm335, %v348, %v349
        %v351 = vrot.slane %v281, 7
        %v352 = vrot.slane %v282, 7
        %v353 = vsel %vm335, %v351, %v352
        %v354 = vrot.slane %v283, 7
        %v355 = vrot.slane %v284, 7
        %v356 = vsel %vm335, %v354, %v355
        %v357 = vrot.slane %v285, 7
        %v358 = vrot.slane %v286, 7
        %v359 = vsel %vm335, %v357, %v358
        %v360 = vrot.slane %v287, 7
        %v361 = vrot.slane %v288, 7
        %v362 = vsel %vm335, %v360, %v361
        %v363 = vrot.slane %v289, 7
        %v364 = vrot.slane %v290, 7
        %v365 = vsel %vm335, %v363, %v364
        %v366 = vrot.slane %v291, 7
        %v367 = vrot.slane %v292, 7
        %v368 = vsel %vm335, %v366, %v367
        %v369 = vrot.slane %v293, 7
        %v370 = vrot.slane %v294, 7
        %v371 = vsel %vm335, %v369, %v370
        %v372 = vrot.slane %v295, 7
        %v373 = vrot.slane %v296, 7
        %v374 = vsel %vm335, %v372, %v373
        %v375 = vrot.slane %v297, 7
        %v376 = vrot.slane %v298, 7
        %v377 = vsel %vm335, %v375, %v376
        %v378 = vrot.slane %v299, 7
        %v379 = vrot.slane %v300, 7
        %v380 = vsel %vm335, %v378, %v379
        %v381 = vrot.slane %v301, 7
        %v382 = vrot.slane %v302, 7
        %v383 = vsel %vm335, %v381, %v382
        %v416 = vsel %vm335, 0.0, %v336
        %v417 = vsel %vm335, 0.0, %v339
        %v418 = vsel %vm335, 0.0, %v342
        %v419 = vsel %vm335, 0.0, %v345
        %v420 = vsel %vm335, 0.0, %v348
        %v421 = vsel %vm335, 0.0, %v351
        %v422 = vsel %vm335, 0.0, %v354
        %v423 = vsel %vm335, 0.0, %v357
        %v424 = vsel %vm335, 0.0, %v360
        %v425 = vsel %vm335, 0.0, %v363
        %v426 = vsel %vm335, 0.0, %v366
        %v427 = vsel %vm335, 0.0, %v369
        %v428 = vsel %vm335, 0.0, %v372
        %v429 = vsel %vm335, 0.0, %v375
        %v430 = vsel %vm335, 0.0, %v378
        %v431 = vsel %vm335, 0.0, %v381
        %v432 = vld [vmem:[%s1] sm:$0x1]
        %v433 = vlaneseq
        %v434 = vshrl.u32 %v433, 7
        %v435 = vsub.s32 0, %v434
        %v436 = vrot.slane %v432, %v435
        %v437 = vmul.f32 %v416, %v436
        %v438 = vmul.f32 %v338, %v436
        %v439 = vmul.f32 %v417, %v436
        %v440 = vmul.f32 %v341, %v436
        %v441 = vmul.f32 %v418, %v436
        %v442 = vmul.f32 %v344, %v436
        %v443 = vmul.f32 %v419, %v436
        %v444 = vmul.f32 %v347, %v436
        %v445 = vmul.f32 %v420, %v436
        %v446 = vmul.f32 %v350, %v436
        %v447 = vmul.f32 %v421, %v436
        %v448 = vmul.f32 %v353, %v436
        %v449 = vmul.f32 %v422, %v436
        %v450 = vmul.f32 %v356, %v436
        %v451 = vmul.f32 %v423, %v436
        %v452 = vmul.f32 %v359, %v436
        %v453 = vmul.f32 %v424, %v436
        %v454 = vmul.f32 %v362, %v436
        %v455 = vmul.f32 %v425, %v436
        %v456 = vmul.f32 %v365, %v436
        %v457 = vmul.f32 %v426, %v436
        %v458 = vmul.f32 %v368, %v436
        %v459 = vmul.f32 %v427, %v436
        %v460 = vmul.f32 %v371, %v436
        %v461 = vmul.f32 %v428, %v436
        %v462 = vmul.f32 %v374, %v436
        %v463 = vmul.f32 %v429, %v436
        %v464 = vmul.f32 %v377, %v436
        %v465 = vmul.f32 %v430, %v436
        %v466 = vmul.f32 %v380, %v436
        %v467 = vmul.f32 %v431, %v436
        %v468 = vmul.f32 %v383, %v436
        %v469 = vadd.f32 %v437, 0.0
        %v470 = vadd.f32 %v438, 0.0
        %v471 = vadd.f32 %v439, 0.0
        %v472 = vadd.f32 %v440, 0.0
        %v473 = vadd.f32 %v441, 0.0
        %v474 = vadd.f32 %v442, 0.0
        %v475 = vadd.f32 %v443, 0.0
        %v476 = vadd.f32 %v444, 0.0
        %v477 = vadd.f32 %v445, 0.0
        %v478 = vadd.f32 %v446, 0.0
        %v479 = vadd.f32 %v447, 0.0
        %v480 = vadd.f32 %v448, 0.0
        %v481 = vadd.f32 %v449, 0.0
        %v482 = vadd.f32 %v450, 0.0
        %v483 = vadd.f32 %v451, 0.0
        %v484 = vadd.f32 %v452, 0.0
        %v485 = vadd.f32 %v453, 0.0
        %v486 = vadd.f32 %v454, 0.0
        %v487 = vadd.f32 %v455, 0.0
        %v488 = vadd.f32 %v456, 0.0
        %v489 = vadd.f32 %v457, 0.0
        %v490 = vadd.f32 %v458, 0.0
        %v491 = vadd.f32 %v459, 0.0
        %v492 = vadd.f32 %v460, 0.0
        %v493 = vadd.f32 %v461, 0.0
        %v494 = vadd.f32 %v462, 0.0
        %v495 = vadd.f32 %v463, 0.0
        %v496 = vadd.f32 %v464, 0.0
        %v497 = vadd.f32 %v465, 0.0
        %v498 = vadd.f32 %v466, 0.0
        %v499 = vadd.f32 %v467, 0.0
        %v500 = vadd.f32 %v468, 0.0
        %v501 = vld [vmem:[%s1 + $0x1] sm:$0x1]
        %v502 = vlaneseq
        %v503 = vshrl.u32 %v502, 7
        %v504 = vsub.s32 0, %v503
        %v505 = vrot.slane %v501, %v504
        %v506 = vmul.f32 %v271, %v505
        %v507 = vmul.f32 %v272, %v505
        %v508 = vmul.f32 %v273, %v505
        %v509 = vmul.f32 %v274, %v505
        %v510 = vmul.f32 %v275, %v505
        %v511 = vmul.f32 %v276, %v505
        %v512 = vmul.f32 %v277, %v505
        %v513 = vmul.f32 %v278, %v505
        %v514 = vmul.f32 %v279, %v505
        %v515 = vmul.f32 %v280, %v505
        %v516 = vmul.f32 %v281, %v505
        %v517 = vmul.f32 %v282, %v505
        %v518 = vmul.f32 %v283, %v505
        %v519 = vmul.f32 %v284, %v505
        %v520 = vmul.f32 %v285, %v505
        %v521 = vmul.f32 %v286, %v505
        %v522 = vmul.f32 %v287, %v505
        %v523 = vmul.f32 %v288, %v505
        %v524 = vmul.f32 %v289, %v505
        %v525 = vmul.f32 %v290, %v505
        %v526 = vmul.f32 %v291, %v505
        %v527 = vmul.f32 %v292, %v505
        %v528 = vmul.f32 %v293, %v505
        %v529 = vmul.f32 %v294, %v505
        %v530 = vmul.f32 %v295, %v505
        %v531 = vmul.f32 %v296, %v505
        %v532 = vmul.f32 %v297, %v505
        %v533 = vmul.f32 %v298, %v505
        %v534 = vmul.f32 %v299, %v505
        %v535 = vmul.f32 %v300, %v505
        %v536 = vmul.f32 %v301, %v505
        %v537 = vmul.f32 %v302, %v505
        %v538 = vadd.f32 %v469, %v506
        %v539 = vadd.f32 %v470, %v507
        %v540 = vadd.f32 %v471, %v508
        %v541 = vadd.f32 %v472, %v509
        %v542 = vadd.f32 %v473, %v510
        %v543 = vadd.f32 %v474, %v511
        %v544 = vadd.f32 %v475, %v512
        %v545 = vadd.f32 %v476, %v513
        %v546 = vadd.f32 %v477, %v514
        %v547 = vadd.f32 %v478, %v515
        %v548 = vadd.f32 %v479, %v516
        %v549 = vadd.f32 %v480, %v517
        %v550 = vadd.f32 %v481, %v518
        %v551 = vadd.f32 %v482, %v519
        %v552 = vadd.f32 %v483, %v520
        %v553 = vadd.f32 %v484, %v521
        %v554 = vadd.f32 %v485, %v522
        %v555 = vadd.f32 %v486, %v523
        %v556 = vadd.f32 %v487, %v524
        %v557 = vadd.f32 %v488, %v525
        %v558 = vadd.f32 %v489, %v526
        %v559 = vadd.f32 %v490, %v527
        %v560 = vadd.f32 %v491, %v528
        %v561 = vadd.f32 %v492, %v529
        %v562 = vadd.f32 %v493, %v530
        %v563 = vadd.f32 %v494, %v531
        %v564 = vadd.f32 %v495, %v532
        %v565 = vadd.f32 %v496, %v533
        %v566 = vadd.f32 %v497, %v534
        %v567 = vadd.f32 %v498, %v535
        %v568 = vadd.f32 %v499, %v536
        %v569 = vadd.f32 %v500, %v537
        %vm570 = vcmask 1046528
        %v571 = vrot.slane %v271, 1
        %v572 = vrot.slane %v272, 1
        %v573 = vsel %vm570, %v571, %v572
        %v574 = vrot.slane %v273, 1
        %v575 = vrot.slane %v274, 1
        %v576 = vsel %vm570, %v574, %v575
        %v577 = vrot.slane %v275, 1
        %v578 = vrot.slane %v276, 1
        %v579 = vsel %vm570, %v577, %v578
        %v580 = vrot.slane %v277, 1
        %v581 = vrot.slane %v278, 1
        %v582 = vsel %vm570, %v580, %v581
        %v583 = vrot.slane %v279, 1
        %v584 = vrot.slane %v280, 1
        %v585 = vsel %vm570, %v583, %v584
        %v586 = vrot.slane %v281, 1
        %v587 = vrot.slane %v282, 1
        %v588 = vsel %vm570, %v586, %v587
        %v589 = vrot.slane %v283, 1
        %v590 = vrot.slane %v284, 1
        %v591 = vsel %vm570, %v589, %v590
        %v592 = vrot.slane %v285, 1
        %v593 = vrot.slane %v286, 1
        %v594 = vsel %vm570, %v592, %v593
        %v595 = vrot.slane %v287, 1
        %v596 = vrot.slane %v288, 1
        %v597 = vsel %vm570, %v595, %v596
        %v598 = vrot.slane %v289, 1
        %v599 = vrot.slane %v290, 1
        %v600 = vsel %vm570, %v598, %v599
        %v601 = vrot.slane %v291, 1
        %v602 = vrot.slane %v292, 1
        %v603 = vsel %vm570, %v601, %v602
        %v604 = vrot.slane %v293, 1
        %v605 = vrot.slane %v294, 1
        %v606 = vsel %vm570, %v604, %v605
        %v607 = vrot.slane %v295, 1
        %v608 = vrot.slane %v296, 1
        %v609 = vsel %vm570, %v607, %v608
        %v610 = vrot.slane %v297, 1
        %v611 = vrot.slane %v298, 1
        %v612 = vsel %vm570, %v610, %v611
        %v613 = vrot.slane %v299, 1
        %v614 = vrot.slane %v300, 1
        %v615 = vsel %vm570, %v613, %v614
        %v616 = vrot.slane %v301, 1
        %v617 = vrot.slane %v302, 1
        %v618 = vsel %vm570, %v616, %v617
        %v651 = vsel %vm570, %v572, 0.0
        %v652 = vsel %vm570, %v575, 0.0
        %v653 = vsel %vm570, %v578, 0.0
        %v654 = vsel %vm570, %v581, 0.0
        %v655 = vsel %vm570, %v584, 0.0
        %v656 = vsel %vm570, %v587, 0.0
        %v657 = vsel %vm570, %v590, 0.0
        %v658 = vsel %vm570, %v593, 0.0
        %v659 = vsel %vm570, %v596, 0.0
        %v660 = vsel %vm570, %v599, 0.0
        %v661 = vsel %vm570, %v602, 0.0
        %v662 = vsel %vm570, %v605, 0.0
        %v663 = vsel %vm570, %v608, 0.0
        %v664 = vsel %vm570, %v611, 0.0
        %v665 = vsel %vm570, %v614, 0.0
        %v666 = vsel %vm570, %v617, 0.0
        %v667 = vld [vmem:[%s1 + $0x2] sm:$0x1]
        %v668 = vlaneseq
        %v669 = vshrl.u32 %v668, 7
        %v670 = vsub.s32 0, %v669
        %v671 = vrot.slane %v667, %v670
        %v672 = vmul.f32 %v573, %v671
        %v673 = vmul.f32 %v651, %v671
        %v674 = vmul.f32 %v576, %v671
        %v675 = vmul.f32 %v652, %v671
        %v676 = vmul.f32 %v579, %v671
        %v677 = vmul.f32 %v653, %v671
        %v678 = vmul.f32 %v582, %v671
        %v679 = vmul.f32 %v654, %v671
        %v680 = vmul.f32 %v585, %v671
        %v681 = vmul.f32 %v655, %v671
        %v682 = vmul.f32 %v588, %v671
        %v683 = vmul.f32 %v656, %v671
        %v684 = vmul.f32 %v591, %v671
        %v685 = vmul.f32 %v657, %v671
        %v686 = vmul.f32 %v594, %v671
        %v687 = vmul.f32 %v658, %v671
        %v688 = vmul.f32 %v597, %v671
        %v689 = vmul.f32 %v659, %v671
        %v690 = vmul.f32 %v600, %v671
        %v691 = vmul.f32 %v660, %v671
        %v692 = vmul.f32 %v603, %v671
        %v693 = vmul.f32 %v661, %v671
        %v694 = vmul.f32 %v606, %v671
        %v695 = vmul.f32 %v662, %v671
        %v696 = vmul.f32 %v609, %v671
        %v697 = vmul.f32 %v663, %v671
        %v698 = vmul.f32 %v612, %v671
        %v699 = vmul.f32 %v664, %v671
        %v700 = vmul.f32 %v615, %v671
        %v701 = vmul.f32 %v665, %v671
        %v702 = vmul.f32 %v618, %v671
        %v703 = vmul.f32 %v666, %v671
        %v704 = vadd.f32 %v538, %v672
        %v705 = vadd.f32 %v539, %v673
        %v706 = vadd.f32 %v540, %v674
        %v707 = vadd.f32 %v541, %v675
        %v708 = vadd.f32 %v542, %v676
        %v709 = vadd.f32 %v543, %v677
        %v710 = vadd.f32 %v544, %v678
        %v711 = vadd.f32 %v545, %v679
        %v712 = vadd.f32 %v546, %v680
        %v713 = vadd.f32 %v547, %v681
        %v714 = vadd.f32 %v548, %v682
        %v715 = vadd.f32 %v549, %v683
        %v716 = vadd.f32 %v550, %v684
        %v717 = vadd.f32 %v551, %v685
        %v718 = vadd.f32 %v552, %v686
        %v719 = vadd.f32 %v553, %v687
        %v720 = vadd.f32 %v554, %v688
        %v721 = vadd.f32 %v555, %v689
        %v722 = vadd.f32 %v556, %v690
        %v723 = vadd.f32 %v557, %v691
        %v724 = vadd.f32 %v558, %v692
        %v725 = vadd.f32 %v559, %v693
        %v726 = vadd.f32 %v560, %v694
        %v727 = vadd.f32 %v561, %v695
        %v728 = vadd.f32 %v562, %v696
        %v729 = vadd.f32 %v563, %v697
        %v730 = vadd.f32 %v564, %v698
        %v731 = vadd.f32 %v565, %v699
        %v732 = vadd.f32 %v566, %v700
        %v733 = vadd.f32 %v567, %v701
        %v734 = vadd.f32 %v568, %v702
        %v735 = vadd.f32 %v569, %v703
        %v736 = vld [vmem:[%s2] sm:$0x1]
        %v738 = vlaneseq
        %v739 = vshrl.u32 %v738, 7
        %v740 = vsub.s32 0, %v739
        %v741 = vrot.slane %v736, %v740
        %v743 = vadd.f32 %v704, %v741
        %v744 = vadd.f32 %v705, %v741
        %v745 = vadd.f32 %v706, %v741
        %v746 = vadd.f32 %v707, %v741
        %v747 = vadd.f32 %v708, %v741
        %v748 = vadd.f32 %v709, %v741
        %v749 = vadd.f32 %v710, %v741
        %v750 = vadd.f32 %v711, %v741
        %v751 = vadd.f32 %v712, %v741
        %v752 = vadd.f32 %v713, %v741
        %v753 = vadd.f32 %v714, %v741
        %v754 = vadd.f32 %v715, %v741
        %v755 = vadd.f32 %v716, %v741
        %v756 = vadd.f32 %v717, %v741
        %v757 = vadd.f32 %v718, %v741
        %v758 = vadd.f32 %v719, %v741
        %v759 = vadd.f32 %v720, %v741
        %v760 = vadd.f32 %v721, %v741
        %v761 = vadd.f32 %v722, %v741
        %v762 = vadd.f32 %v723, %v741
        %v763 = vadd.f32 %v724, %v741
        %v764 = vadd.f32 %v725, %v741
        %v765 = vadd.f32 %v726, %v741
        %v766 = vadd.f32 %v727, %v741
        %v767 = vadd.f32 %v728, %v741
        %v768 = vadd.f32 %v729, %v741
        %v769 = vadd.f32 %v730, %v741
        %v770 = vadd.f32 %v731, %v741
        %v771 = vadd.f32 %v732, %v741
        %v772 = vadd.f32 %v733, %v741
        %v773 = vadd.f32 %v734, %v741
        %v774 = vadd.f32 %v735, %v741
        %v775 = vld [vmem:[%s3] sm:$0x1]
        %v776 = vlaneseq
        %v777 = vshrl.u32 %v776, 7
        %v778 = vsub.s32 0, %v777
        %v779 = vrot.slane %v775, %v778
        %v780 = vmul.f32 %v779, 0.0
        %v781 = vmul.f32 %v743, %v779
        %v782 = vmul.f32 %v744, %v779
        %v783 = vmul.f32 %v745, %v779
        %v784 = vmul.f32 %v746, %v779
        %v785 = vmul.f32 %v747, %v779
        %v786 = vmul.f32 %v748, %v779
        %v787 = vmul.f32 %v749, %v779
        %v788 = vmul.f32 %v750, %v779
        %v789 = vmul.f32 %v751, %v779
        %v790 = vmul.f32 %v752, %v779
        %v791 = vmul.f32 %v753, %v779
        %v792 = vmul.f32 %v754, %v779
        %v793 = vmul.f32 %v755, %v779
        %v794 = vmul.f32 %v756, %v779
        %v795 = vmul.f32 %v757, %v779
        %v796 = vmul.f32 %v758, %v779
        %v797 = vmul.f32 %v759, %v779
        %v798 = vmul.f32 %v760, %v779
        %v799 = vmul.f32 %v761, %v779
        %v800 = vmul.f32 %v762, %v779
        %v801 = vmul.f32 %v763, %v779
        %v802 = vmul.f32 %v764, %v779
        %v803 = vmul.f32 %v765, %v779
        %v804 = vmul.f32 %v766, %v779
        %v805 = vmul.f32 %v767, %v779
        %v806 = vmul.f32 %v768, %v779
        %v807 = vmul.f32 %v769, %v779
        %v808 = vmul.f32 %v770, %v779
        %v809 = vmul.f32 %v771, %v779
        %v810 = vmul.f32 %v772, %v779
        %v811 = vadd.f32 %v780, 0.0
        %v812 = vadd.f32 %v781, 0.0
        %v813 = vadd.f32 %v782, 0.0
        %v814 = vadd.f32 %v783, 0.0
        %v815 = vadd.f32 %v784, 0.0
        %v816 = vadd.f32 %v785, 0.0
        %v817 = vadd.f32 %v786, 0.0
        %v818 = vadd.f32 %v787, 0.0
        %v819 = vadd.f32 %v788, 0.0
        %v820 = vadd.f32 %v789, 0.0
        %v821 = vadd.f32 %v790, 0.0
        %v822 = vadd.f32 %v791, 0.0
        %v823 = vadd.f32 %v792, 0.0
        %v824 = vadd.f32 %v793, 0.0
        %v825 = vadd.f32 %v794, 0.0
        %v826 = vadd.f32 %v795, 0.0
        %v827 = vadd.f32 %v796, 0.0
        %v828 = vadd.f32 %v797, 0.0
        %v829 = vadd.f32 %v798, 0.0
        %v830 = vadd.f32 %v799, 0.0
        %v831 = vadd.f32 %v800, 0.0
        %v832 = vadd.f32 %v801, 0.0
        %v833 = vadd.f32 %v802, 0.0
        %v834 = vadd.f32 %v803, 0.0
        %v835 = vadd.f32 %v804, 0.0
        %v836 = vadd.f32 %v805, 0.0
        %v837 = vadd.f32 %v806, 0.0
        %v838 = vadd.f32 %v807, 0.0
        %v839 = vadd.f32 %v808, 0.0
        %v840 = vadd.f32 %v809, 0.0
        %v841 = vadd.f32 %v810, 0.0
        %v842 = vld [vmem:[%s3 + $0x1] sm:$0x1]
        %v843 = vlaneseq
        %v844 = vshrl.u32 %v843, 7
        %v845 = vsub.s32 0, %v844
        %v846 = vrot.slane %v842, %v845
        %v847 = vmul.f32 %v743, %v846
        %v848 = vmul.f32 %v744, %v846
        %v849 = vmul.f32 %v745, %v846
        %v850 = vmul.f32 %v746, %v846
        %v851 = vmul.f32 %v747, %v846
        %v852 = vmul.f32 %v748, %v846
        %v853 = vmul.f32 %v749, %v846
        %v854 = vmul.f32 %v750, %v846
        %v855 = vmul.f32 %v751, %v846
        %v856 = vmul.f32 %v752, %v846
        %v857 = vmul.f32 %v753, %v846
        %v858 = vmul.f32 %v754, %v846
        %v859 = vmul.f32 %v755, %v846
        %v860 = vmul.f32 %v756, %v846
        %v861 = vmul.f32 %v757, %v846
        %v862 = vmul.f32 %v758, %v846
        %v863 = vmul.f32 %v759, %v846
        %v864 = vmul.f32 %v760, %v846
        %v865 = vmul.f32 %v761, %v846
        %v866 = vmul.f32 %v762, %v846
        %v867 = vmul.f32 %v763, %v846
        %v868 = vmul.f32 %v764, %v846
        %v869 = vmul.f32 %v765, %v846
        %v870 = vmul.f32 %v766, %v846
        %v871 = vmul.f32 %v767, %v846
        %v872 = vmul.f32 %v768, %v846
        %v873 = vmul.f32 %v769, %v846
        %v874 = vmul.f32 %v770, %v846
        %v875 = vmul.f32 %v771, %v846
        %v876 = vmul.f32 %v772, %v846
        %v877 = vmul.f32 %v773, %v846
        %v878 = vmul.f32 %v774, %v846
        %v879 = vadd.f32 %v811, %v847
        %v880 = vadd.f32 %v811, %v848
        %v881 = vadd.f32 %v812, %v849
        %v882 = vadd.f32 %v813, %v850
        %v883 = vadd.f32 %v814, %v851
        %v884 = vadd.f32 %v815, %v852
        %v885 = vadd.f32 %v816, %v853
        %v886 = vadd.f32 %v817, %v854
        %v887 = vadd.f32 %v818, %v855
        %v888 = vadd.f32 %v819, %v856
        %v889 = vadd.f32 %v820, %v857
        %v890 = vadd.f32 %v821, %v858
        %v891 = vadd.f32 %v822, %v859
        %v892 = vadd.f32 %v823, %v860
        %v893 = vadd.f32 %v824, %v861
        %v894 = vadd.f32 %v825, %v862
        %v895 = vadd.f32 %v826, %v863
        %v896 = vadd.f32 %v827, %v864
        %v897 = vadd.f32 %v828, %v865
        %v898 = vadd.f32 %v829, %v866
        %v899 = vadd.f32 %v830, %v867
        %v900 = vadd.f32 %v831, %v868
        %v901 = vadd.f32 %v832, %v869
        %v902 = vadd.f32 %v833, %v870
        %v903 = vadd.f32 %v834, %v871
        %v904 = vadd.f32 %v835, %v872
        %v905 = vadd.f32 %v836, %v873
        %v906 = vadd.f32 %v837, %v874
        %v907 = vadd.f32 %v838, %v875
        %v908 = vadd.f32 %v839, %v876
        %v909 = vadd.f32 %v840, %v877
        %v910 = vadd.f32 %v841, %v878
        %v911 = vld [vmem:[%s3 + $0x2] sm:$0x1]
        %v912 = vlaneseq
        %v913 = vshrl.u32 %v912, 7
        %v914 = vsub.s32 0, %v913
        %v915 = vrot.slane %v911, %v914
        %v916 = vmul.f32 %v745, %v915
        %v917 = vmul.f32 %v746, %v915
        %v918 = vmul.f32 %v747, %v915
        %v919 = vmul.f32 %v748, %v915
        %v920 = vmul.f32 %v749, %v915
        %v921 = vmul.f32 %v750, %v915
        %v922 = vmul.f32 %v751, %v915
        %v923 = vmul.f32 %v752, %v915
        %v924 = vmul.f32 %v753, %v915
        %v925 = vmul.f32 %v754, %v915
        %v926 = vmul.f32 %v755, %v915
        %v927 = vmul.f32 %v756, %v915
        %v928 = vmul.f32 %v757, %v915
        %v929 = vmul.f32 %v758, %v915
        %v930 = vmul.f32 %v759, %v915
        %v931 = vmul.f32 %v760, %v915
        %v932 = vmul.f32 %v761, %v915
        %v933 = vmul.f32 %v762, %v915
        %v934 = vmul.f32 %v763, %v915
        %v935 = vmul.f32 %v764, %v915
        %v936 = vmul.f32 %v765, %v915
        %v937 = vmul.f32 %v766, %v915
        %v938 = vmul.f32 %v767, %v915
        %v939 = vmul.f32 %v768, %v915
        %v940 = vmul.f32 %v769, %v915
        %v941 = vmul.f32 %v770, %v915
        %v942 = vmul.f32 %v771, %v915
        %v943 = vmul.f32 %v772, %v915
        %v944 = vmul.f32 %v773, %v915
        %v945 = vmul.f32 %v774, %v915
        %v946 = vmul.f32 %v915, 0.0
        %v947 = vadd.f32 %v879, %v916
        %v948 = vadd.f32 %v880, %v917
        %v949 = vadd.f32 %v881, %v918
        %v950 = vadd.f32 %v882, %v919
        %v951 = vadd.f32 %v883, %v920
        %v952 = vadd.f32 %v884, %v921
        %v953 = vadd.f32 %v885, %v922
        %v954 = vadd.f32 %v886, %v923
        %v955 = vadd.f32 %v887, %v924
        %v956 = vadd.f32 %v888, %v925
        %v957 = vadd.f32 %v889, %v926
        %v958 = vadd.f32 %v890, %v927
        %v959 = vadd.f32 %v891, %v928
        %v960 = vadd.f32 %v892, %v929
        %v961 = vadd.f32 %v893, %v930
        %v962 = vadd.f32 %v894, %v931
        %v963 = vadd.f32 %v895, %v932
        %v964 = vadd.f32 %v896, %v933
        %v965 = vadd.f32 %v897, %v934
        %v966 = vadd.f32 %v898, %v935
        %v967 = vadd.f32 %v899, %v936
        %v968 = vadd.f32 %v900, %v937
        %v969 = vadd.f32 %v901, %v938
        %v970 = vadd.f32 %v902, %v939
        %v971 = vadd.f32 %v903, %v940
        %v972 = vadd.f32 %v904, %v941
        %v973 = vadd.f32 %v905, %v942
        %v974 = vadd.f32 %v906, %v943
        %v975 = vadd.f32 %v907, %v944
        %v976 = vadd.f32 %v908, %v945
        %v977 = vadd.f32 %v909, %v946
        %v978 = vadd.f32 %v910, %v946
        %vm979 = vcmask 31744
        %980 = vst.msk [vmem:[%s270] sm:$0xff] %vm979, %v947
        %981 = vst.msk [vmem:[%s270 + $0x8] sm:$0xff] %vm979, %v948
        %982 = vst.msk [vmem:[%s270 + $0x10] sm:$0xff] %vm979, %v949
        %983 = vst.msk [vmem:[%s270 + $0x18] sm:$0xff] %vm979, %v950
        %984 = vst.msk [vmem:[%s270 + $0x20] sm:$0xff] %vm979, %v951
        %985 = vst.msk [vmem:[%s270 + $0x28] sm:$0xff] %vm979, %v952
        %986 = vst.msk [vmem:[%s270 + $0x30] sm:$0xff] %vm979, %v953
        %987 = vst.msk [vmem:[%s270 + $0x38] sm:$0xff] %vm979, %v954
        %988 = vst.msk [vmem:[%s270 + $0x40] sm:$0xff] %vm979, %v955
        %989 = vst.msk [vmem:[%s270 + $0x48] sm:$0xff] %vm979, %v956
        %990 = vst.msk [vmem:[%s270 + $0x50] sm:$0xff] %vm979, %v957
        %991 = vst.msk [vmem:[%s270 + $0x58] sm:$0xff] %vm979, %v958
        %992 = vst.msk [vmem:[%s270 + $0x60] sm:$0xff] %vm979, %v959
        %993 = vst.msk [vmem:[%s270 + $0x68] sm:$0xff] %vm979, %v960
        %994 = vst.msk [vmem:[%s270 + $0x70] sm:$0xff] %vm979, %v961
        %995 = vst.msk [vmem:[%s270 + $0x78] sm:$0xff] %vm979, %v962
        %996 = vst.msk [vmem:[%s270 + $0x80] sm:$0xff] %vm979, %v963
        %997 = vst.msk [vmem:[%s270 + $0x88] sm:$0xff] %vm979, %v964
        %998 = vst.msk [vmem:[%s270 + $0x90] sm:$0xff] %vm979, %v965
        %999 = vst.msk [vmem:[%s270 + $0x98] sm:$0xff] %vm979, %v966
        %1000 = vst.msk [vmem:[%s270 + $0xa0] sm:$0xff] %vm979, %v967
        %1001 = vst.msk [vmem:[%s270 + $0xa8] sm:$0xff] %vm979, %v968
        %1002 = vst.msk [vmem:[%s270 + $0xb0] sm:$0xff] %vm979, %v969
        %1003 = vst.msk [vmem:[%s270 + $0xb8] sm:$0xff] %vm979, %v970
        %1004 = vst.msk [vmem:[%s270 + $0xc0] sm:$0xff] %vm979, %v971
        %1005 = vst.msk [vmem:[%s270 + $0xc8] sm:$0xff] %vm979, %v972
        %1006 = vst.msk [vmem:[%s270 + $0xd0] sm:$0xff] %vm979, %v973
        %1007 = vst.msk [vmem:[%s270 + $0xd8] sm:$0xff] %vm979, %v974
        %1008 = vst.msk [vmem:[%s270 + $0xe0] sm:$0xff] %vm979, %v975
        %1009 = vst.msk [vmem:[%s270 + $0xe8] sm:$0xff] %vm979, %v976
        %1010 = vst.msk [vmem:[%s270 + $0xf0] sm:$0xff] %vm979, %v977
        %1011 = vst.msk [vmem:[%s270 + $0xf8] sm:$0xff] %vm979, %v978
        %v1012 = vsel %vm979, %v947, 0.0
        %v1013 = vsel %vm979, %v948, 0.0
        %v1014 = vadd.f32 %v1012, %v1013
        %v1015 = vsel %vm979, %v949, 0.0
        %v1016 = vadd.f32 %v1014, %v1015
        %v1017 = vsel %vm979, %v950, 0.0
        %v1018 = vadd.f32 %v1016, %v1017
        %v1019 = vsel %vm979, %v951, 0.0
        %v1020 = vadd.f32 %v1018, %v1019
        %v1021 = vsel %vm979, %v952, 0.0
        %v1022 = vadd.f32 %v1020, %v1021
        %v1023 = vsel %vm979, %v953, 0.0
        %v1024 = vadd.f32 %v1022, %v1023
        %v1025 = vsel %vm979, %v954, 0.0
        %v1026 = vadd.f32 %v1024, %v1025
        %v1027 = vsel %vm979, %v955, 0.0
        %v1028 = vadd.f32 %v1026, %v1027
        %v1029 = vsel %vm979, %v956, 0.0
        %v1030 = vadd.f32 %v1028, %v1029
        %v1031 = vsel %vm979, %v957, 0.0
        %v1032 = vadd.f32 %v1030, %v1031
        %v1033 = vsel %vm979, %v958, 0.0
        %v1034 = vadd.f32 %v1032, %v1033
        %v1035 = vsel %vm979, %v959, 0.0
        %v1036 = vadd.f32 %v1034, %v1035
        %v1037 = vsel %vm979, %v960, 0.0
        %v1038 = vadd.f32 %v1036, %v1037
        %v1039 = vsel %vm979, %v961, 0.0
        %v1040 = vadd.f32 %v1038, %v1039
        %v1041 = vsel %vm979, %v962, 0.0
        %v1042 = vadd.f32 %v1040, %v1041
        %v1043 = vsel %vm979, %v963, 0.0
        %v1044 = vadd.f32 %v1042, %v1043
        %v1045 = vsel %vm979, %v964, 0.0
        %v1046 = vadd.f32 %v1044, %v1045
        %v1047 = vsel %vm979, %v965, 0.0
        %v1048 = vadd.f32 %v1046, %v1047
        %v1049 = vsel %vm979, %v966, 0.0
        %v1050 = vadd.f32 %v1048, %v1049
        %v1051 = vsel %vm979, %v967, 0.0
        %v1052 = vadd.f32 %v1050, %v1051
        %v1053 = vsel %vm979, %v968, 0.0
        %v1054 = vadd.f32 %v1052, %v1053
        %v1055 = vsel %vm979, %v969, 0.0
        %v1056 = vadd.f32 %v1054, %v1055
        %v1057 = vsel %vm979, %v970, 0.0
        %v1058 = vadd.f32 %v1056, %v1057
        %v1059 = vsel %vm979, %v971, 0.0
        %v1060 = vadd.f32 %v1058, %v1059
        %v1061 = vsel %vm979, %v972, 0.0
        %v1062 = vadd.f32 %v1060, %v1061
        %v1063 = vsel %vm979, %v973, 0.0
        %v1064 = vadd.f32 %v1062, %v1063
        %v1065 = vsel %vm979, %v974, 0.0
        %v1066 = vadd.f32 %v1064, %v1065
        %v1067 = vsel %vm979, %v975, 0.0
        %v1068 = vadd.f32 %v1066, %v1067
        %v1069 = vsel %vm979, %v976, 0.0
        %v1070 = vadd.f32 %v1068, %v1069
        %v1071 = vsel %vm979, %v977, 0.0
        %v1072 = vadd.f32 %v1070, %v1071
        %v1073 = vsel %vm979, %v978, 0.0
        %v1074 = vadd.f32 %v1072, %v1073
        %v1075 = vrot.slane %v1074, 4
        %v1076 = vadd.f32 %v1074, %v1075
        %v1077 = vrot.slane %v1076, 2
        %v1078 = vadd.f32 %v1076, %v1077
        %v1079 = vrot.slane %v1078, 1
        %v1080 = vadd.f32 %v1078, %v1079
        %vm1081 = vcmask 24576
        %1082 = vst.msk [vmem:[%s254] sm:$0x1] %vm1081, %v1080
        %v1083 = vmul.f32 %v947, %v947
        %v1084 = vmul.f32 %v948, %v948
        %v1085 = vmul.f32 %v949, %v949
        %v1086 = vmul.f32 %v950, %v950
        %v1087 = vmul.f32 %v951, %v951
        %v1088 = vmul.f32 %v952, %v952
        %v1089 = vmul.f32 %v953, %v953
        %v1090 = vmul.f32 %v954, %v954
        %v1091 = vmul.f32 %v955, %v955
        %v1092 = vmul.f32 %v956, %v956
        %v1093 = vmul.f32 %v957, %v957
        %v1094 = vmul.f32 %v958, %v958
        %v1095 = vmul.f32 %v959, %v959
        %v1096 = vmul.f32 %v960, %v960
        %v1097 = vmul.f32 %v961, %v961
        %v1098 = vmul.f32 %v962, %v962
        %v1099 = vmul.f32 %v963, %v963
        %v1100 = vmul.f32 %v964, %v964
        %v1101 = vmul.f32 %v965, %v965
        %v1102 = vmul.f32 %v966, %v966
        %v1103 = vmul.f32 %v967, %v967
        %v1104 = vmul.f32 %v968, %v968
        %v1105 = vmul.f32 %v969, %v969
        %v1106 = vmul.f32 %v970, %v970
        %v1107 = vmul.f32 %v971, %v971
        %v1108 = vmul.f32 %v972, %v972
        %v1109 = vmul.f32 %v973, %v973
        %v1110 = vmul.f32 %v974, %v974
        %v1111 = vmul.f32 %v975, %v975
        %v1112 = vmul.f32 %v976, %v976
        %v1113 = vmul.f32 %v977, %v977
        %v1114 = vmul.f32 %v978, %v978
        %v1115 = vsel %vm979, %v1083, 0.0
        %v1116 = vsel %vm979, %v1084, 0.0
        %v1117 = vadd.f32 %v1115, %v1116
        %v1118 = vsel %vm979, %v1085, 0.0
        %v1119 = vadd.f32 %v1117, %v1118
        %v1120 = vsel %vm979, %v1086, 0.0
        %v1121 = vadd.f32 %v1119, %v1120
        %v1122 = vsel %vm979, %v1087, 0.0
        %v1123 = vadd.f32 %v1121, %v1122
        %v1124 = vsel %vm979, %v1088, 0.0
        %v1125 = vadd.f32 %v1123, %v1124
        %v1126 = vsel %vm979, %v1089, 0.0
        %v1127 = vadd.f32 %v1125, %v1126
        %v1128 = vsel %vm979, %v1090, 0.0
        %v1129 = vadd.f32 %v1127, %v1128
        %v1130 = vsel %vm979, %v1091, 0.0
        %v1131 = vadd.f32 %v1129, %v1130
        %v1132 = vsel %vm979, %v1092, 0.0
        %v1133 = vadd.f32 %v1131, %v1132
        %v1134 = vsel %vm979, %v1093, 0.0
        %v1135 = vadd.f32 %v1133, %v1134
        %v1136 = vsel %vm979, %v1094, 0.0
        %v1137 = vadd.f32 %v1135, %v1136
        %v1138 = vsel %vm979, %v1095, 0.0
        %v1139 = vadd.f32 %v1137, %v1138
        %v1140 = vsel %vm979, %v1096, 0.0
        %v1141 = vadd.f32 %v1139, %v1140
        %v1142 = vsel %vm979, %v1097, 0.0
        %v1143 = vadd.f32 %v1141, %v1142
        %v1144 = vsel %vm979, %v1098, 0.0
        %v1145 = vadd.f32 %v1143, %v1144
        %v1146 = vsel %vm979, %v1099, 0.0
        %v1147 = vadd.f32 %v1145, %v1146
        %v1148 = vsel %vm979, %v1100, 0.0
        %v1149 = vadd.f32 %v1147, %v1148
        %v1150 = vsel %vm979, %v1101, 0.0
        %v1151 = vadd.f32 %v1149, %v1150
        %v1152 = vsel %vm979, %v1102, 0.0
        %v1153 = vadd.f32 %v1151, %v1152
        %v1154 = vsel %vm979, %v1103, 0.0
        %v1155 = vadd.f32 %v1153, %v1154
        %v1156 = vsel %vm979, %v1104, 0.0
        %v1157 = vadd.f32 %v1155, %v1156
        %v1158 = vsel %vm979, %v1105, 0.0
        %v1159 = vadd.f32 %v1157, %v1158
        %v1160 = vsel %vm979, %v1106, 0.0
        %v1161 = vadd.f32 %v1159, %v1160
        %v1162 = vsel %vm979, %v1107, 0.0
        %v1163 = vadd.f32 %v1161, %v1162
        %v1164 = vsel %vm979, %v1108, 0.0
        %v1165 = vadd.f32 %v1163, %v1164
        %v1166 = vsel %vm979, %v1109, 0.0
        %v1167 = vadd.f32 %v1165, %v1166
        %v1168 = vsel %vm979, %v1110, 0.0
        %v1169 = vadd.f32 %v1167, %v1168
        %v1170 = vsel %vm979, %v1111, 0.0
        %v1171 = vadd.f32 %v1169, %v1170
        %v1172 = vsel %vm979, %v1112, 0.0
        %v1173 = vadd.f32 %v1171, %v1172
        %v1174 = vsel %vm979, %v1113, 0.0
        %v1175 = vadd.f32 %v1173, %v1174
        %v1176 = vsel %vm979, %v1114, 0.0
        %v1177 = vadd.f32 %v1175, %v1176
        %v1178 = vrot.slane %v1177, 4
        %v1179 = vadd.f32 %v1177, %v1178
        %v1180 = vrot.slane %v1179, 2
        %v1181 = vadd.f32 %v1179, %v1180
        %v1182 = vrot.slane %v1181, 1
        %v1183 = vadd.f32 %v1181, %v1182
        %1184 = vst.msk [vmem:[%s260] sm:$0x1] %vm1081, %v1183
        %p1185 = scmp.lt.s32.totalorder %s24, 1
        %s1186 = scalar_select %p1185, %s24, 1
        %s1187 = smul.addr %s1186, 32
        %s1188 = smul.addr %s1187, 8
        %s1189 = scalar_lea.vmem %s4, %s1188
        %s1190 = sand.u32 %s147, 1
        %s1191 = scalar_lea.sflag [#allocation3], %s1190
        %s1192 = sand.u32 %s147, 1
        %s1193 = scalar_lea.vmem [#allocation2], %s1192
        %s1194 = sand.u32 %s173, 1
        %s1195 = scalar_lea.sflag [#allocation5], %s1194
        %s1196 = sand.u32 %s173, 1
        %s1197 = scalar_lea.vmem [#allocation4], %s1196
        // Predicated region
        $region37: #{tpu_custom_call.1} parent=35 // pred_check
          %p1198 = pneg %p131
        $region38: #{tpu_custom_call.1} parent=35 // pred_check_branch
          %1200 = sbr.rel (%p1198) target = $region40
        $region39: #{tpu_custom_call.1} parent=35 // pred_region
          _
        $region40: #{tpu_custom_call.1} parent=35 // pred_fallthru
          _
        // Predicated region
        $region41: #{tpu_custom_call.1} parent=35 // pred_check
          %p1201 = pneg %p157
        $region42: #{tpu_custom_call.1} parent=35 // pred_check_branch
          %1203 = sbr.rel (%p1201) target = $region44
        $region43: #{tpu_custom_call.1} parent=35 // pred_region
          %s1205 = ssub.s32 16, 16
          %1206 = vsyncadd %s1191, %s1205
          %s1207 = smul.addr %s24, 16
          %s1208 = scalar_lea.hbm %s5, %s1207
          %s1210 = sshll.u32 %s1193, 4
          %s1211 = int_to_ptr.vmem [resolvable:$true] %s1210
          %1213 = dma.vmem_to_hbm [thread:$0]  %s1211, 16, %s1208, %s1191
        $region44: #{tpu_custom_call.1} parent=35 // pred_fallthru
          _
        // Predicated region
        $region45: #{tpu_custom_call.1} parent=35 // pred_check
          %p1214 = pneg %p183
        $region46: #{tpu_custom_call.1} parent=35 // pred_check_branch
          %1216 = sbr.rel (%p1214) target = $region48
        $region47: #{tpu_custom_call.1} parent=35 // pred_region
          %s1218 = ssub.s32 16, 16
          %1219 = vsyncadd %s1195, %s1218
          %s1220 = smul.addr %s24, 16
          %s1221 = scalar_lea.hbm %s6, %s1220
          %s1223 = sshll.u32 %s1197, 4
          %s1224 = int_to_ptr.vmem [resolvable:$true] %s1223
          %1226 = dma.vmem_to_hbm [thread:$0]  %s1224, 16, %s1221, %s1195
        $region48: #{tpu_custom_call.1} parent=35 // pred_fallthru
          _
      $region36: #{tpu_custom_call.1} parent=5 // pred_fallthru
        _
      %p1227 = scmp.le.s32.totalorder 2, %s19
      // Predicated region
      $region49: #{tpu_custom_call.1} parent=5 // pred_check
        %p1228 = pneg %p1227
      $region50: #{tpu_custom_call.1} parent=5 // pred_check_branch
        %1230 = sbr.rel (%p1228) target = $region52
      $region51: #{tpu_custom_call.1} parent=5 // pred_region
        %s1231 = ssub.s32 %s19, 2
        // Predicated region
        $region53: #{tpu_custom_call.1} parent=51 // pred_check
          %p1232 = pneg %p137
        $region54: #{tpu_custom_call.1} parent=51 // pred_check_branch
          %1234 = sbr.rel (%p1232) target = $region56
        $region55: #{tpu_custom_call.1} parent=51 // pred_region
          %p1235 = scmp.lt.s32.totalorder %s25, 1
          %s1236 = scalar_select %p1235, %s25, 1
          %s1237 = smul.addr %s1236, 32
          %s1238 = smul.addr %s1237, 8
          %s1239 = scalar_lea.vmem %s4, %s1238
        $region56: #{tpu_custom_call.1} parent=51 // pred_fallthru
          _
        // Predicated region
        $region57: #{tpu_custom_call.1} parent=51 // pred_check
          %p1240 = pneg %p163
        $region58: #{tpu_custom_call.1} parent=51 // pred_check_branch
          %1242 = sbr.rel (%p1240) target = $region60
        $region59: #{tpu_custom_call.1} parent=51 // pred_region
          %s1243 = sand.u32 %s148, 1
          %s1244 = scalar_lea.sflag [#allocation3], %s1243
          %s1245 = sand.u32 %s148, 1
          %s1246 = scalar_lea.vmem [#allocation2], %s1245
          %1247 = dma.done %s1244, 16
        $region60: #{tpu_custom_call.1} parent=51 // pred_fallthru
          _
        // Predicated region
        $region61: #{tpu_custom_call.1} parent=51 // pred_check
          %p1248 = pneg %p189
        $region62: #{tpu_custom_call.1} parent=51 // pred_check_branch
          %1250 = sbr.rel (%p1248) target = $region64
        $region63: #{tpu_custom_call.1} parent=51 // pred_region
          %s1251 = sand.u32 %s174, 1
          %s1252 = scalar_lea.sflag [#allocation5], %s1251
          %s1253 = sand.u32 %s174, 1
          %s1254 = scalar_lea.vmem [#allocation4], %s1253
          %1255 = dma.done %s1252, 16
        $region64: #{tpu_custom_call.1} parent=51 // pred_fallthru
          _
      $region52: #{tpu_custom_call.1} parent=5 // pred_fallthru
        _
    $region6: #{tpu_custom_call.1} parent=1 // loop_footer
      %s23 = sadd.s32 1, %s19
    $region7: #{tpu_custom_call.1} parent=1 // loop_footer_branch
      %18 = sbr.rel target = $region3
    $region8: #{tpu_custom_call.1} parent=1 // loop_exit
      _
    %1256 = vsyncpa [#allocation3], 1
    %s1257 = scalar_lea.sflag [#allocation3], 1
    %1258 = vsyncpa %s1257, 1
    %1259 = vsyncpa [#allocation5], 1
    %s1260 = scalar_lea.sflag [#allocation5], 1
    %1261 = vsyncpa %s1260, 1

</llo_original>
